<compile_context>
chip_gen: v7x
topology: tpu7x:2x2x1
jax: 0.10.0
libtpu: 0.0.40
codegen_flags: <defaults>
</compile_context>

<pallas_src>
import math
from functools import partial

import jax
import jax.numpy as jnp
from jax import lax
from jax.experimental import pallas as pl
from jax.experimental.pallas import tpu as pltpu

IN_CHANNELS = 3
NUM_CLASSES = 3
BN_EPS = 1e-5
VMEM_LIMIT = 48 * 1024 * 1024          # scoped VMEM cap (safe on v5e/v6e/v7x)
TILE_BUDGET = 24 * 1024 * 1024         # target double-buffered block footprint

# (planes, num_blocks, stride) per ResNet-50 layer; (cin, cout) per decoder blk
LAYER_CFG = [(64, 3, 1), (128, 4, 2), (256, 6, 2), (512, 3, 2)]
DEC_CFG = [(2048, 256), (256, 128), (128, 64), (64, 32), (32, 16)]


def _round_up(x, m):
    return (x + m - 1) // m * m


# ---------------------------------------------------------------------------
# Pallas kernels
# ---------------------------------------------------------------------------
def _conv_mm_kernel(*refs, n_k, in_affine, emit_stats, m_valid, tm):
    """Conv-as-matmul tile.

    A [tm, tk] bf16 (optionally relu(A*s+t) fused), W [tk, tn] bf16,
    bias [1, tn] f32 -> O [tm, tn] (bf16/f32).  Optionally also emits the
    row-masked per-output-channel sum / sum-of-squares of the f32 pre-cast
    result so the following BatchNorm never re-reads this activation from HBM.
    """
    a_ref, w_ref, b_ref = refs[0], refs[1], refs[2]
    pos = 3
    s_ref = t_ref = None
    if in_affine:
        s_ref, t_ref = refs[3], refs[4]
        pos = 5
    o_ref = refs[pos]
    sum_ref = sq_ref = None
    if emit_stats:
        sum_ref, sq_ref = refs[pos + 1], refs[pos + 2]
    acc_ref = refs[-1] if n_k > 1 else None

    a = a_ref[...]
    if in_affine:
        a = jnp.maximum(a.astype(jnp.float32) * s_ref[...] + t_ref[...], 0.0)
        a = a.astype(jnp.bfloat16)
    part = jnp.dot(a, w_ref[...], preferred_element_type=jnp.float32)

    def _epilogue(acc):
        out = acc + b_ref[...]
        o_ref[...] = out.astype(o_ref.dtype)
        if emit_stats:
            rows = (lax.broadcasted_iota(jnp.int32, out.shape, 0)
                    + pl.program_id(0) * tm)
            masked = jnp.where(rows < m_valid, out, 0.0)
            sum_ref[...] = jnp.broadcast_to(
                jnp.sum(masked, axis=0, keepdims=True), sum_ref.shape)
            sq_ref[...] = jnp.broadcast_to(
                jnp.sum(masked * masked, axis=0, keepdims=True), sq_ref.shape)

    if n_k == 1:
        _epilogue(part)
    else:
        @pl.when(pl.program_id(2) == 0)
        def _():
            acc_ref[...] = jnp.zeros_like(acc_ref)

        acc_ref[...] += part

        @pl.when(pl.program_id(2) == pl.num_programs(2) - 1)
        def _():
            _epilogue(acc_ref[...])


def _bn_add_relu_kernel(x_ref, s_ref, t_ref, r_ref, rs_ref, rt_ref, o_ref):
    # relu( bn(x) + bn_or_identity(r) ) in a single HBM pass (bottleneck tail).
    y = (x_ref[...].astype(jnp.float32) * s_ref[...] + t_ref[...]
         + r_ref[...].astype(jnp.float32) * rs_ref[...] + rt_ref[...])
    o_ref[...] = jnp.maximum(y, 0.0).astype(o_ref.dtype)


def _max9_kernel(*refs):
    o_ref = refs[-1]
    m = refs[0][...]
    for r in refs[1:-1]:
        m = jnp.maximum(m, r[...])
    o_ref[...] = m


# ---------------------------------------------------------------------------
# Tile selection helpers
# ---------------------------------------------------------------------------
def _pick_tiles(M, Kp, Np):
    tm = min(256, _round_up(M, 16))            # 16-row multiples for bf16 A
    Mp = _round_up(M, tm)
    tn = 512 if Np % 512 == 0 else (256 if Np % 256 == 0 else 128)
    # v7x megacore: keep >= 2 grid steps along a parallel axis when possible.
    if Mp // tm == 1 and Np // tn == 1 and Np % 256 == 0:
        tn = Np // 2

    def _fits(tk):
        fp = (2 * (tm * tk * 2 + tk * tn * 2 + tm * tn * 2)
              + tm * tn * 4 + 4 * 8 * tn * 4)
        return fp <= TILE_BUDGET

    tk = 128
    for cand in (Kp, 8192, 4096, 2048, 1024, 512, 256, 128):
        if cand <= Kp and Kp % cand == 0 and _fits(cand):
            tk = cand                          # whole-K single block when it fits
            break
    return Mp, tm, tk, tn


def _ew_tiles(M, C):
    Cp = _round_up(C, 128)
    tm = max(16, min(1024, ((2 << 20) // (Cp * 2)) // 16 * 16))  # ~2 MiB blocks
    if M < tm:
        tm = _round_up(M, 16)
    Mp = _round_up(M, tm)
    return Mp, Cp, tm


# ---------------------------------------------------------------------------
# Pallas wrappers (called inside the jitted NN ops below)
# ---------------------------------------------------------------------------
def conv_matmul(a, w_p, b_p, n_out, *, in_affine=None, emit_stats=False,
                out_dtype=jnp.bfloat16):
    """a: [M, K]; w_p: [Kp, Np] bf16 (pre-packed); b_p: [1, Np] f32."""
    M, K = a.shape
    Kp, Np = w_p.shape
    Mp, tm, tk, tn = _pick_tiles(M, Kp, Np)
    gm, gn, n_k = Mp // tm, Np // tn, Kp // tk

    a_p = jnp.pad(a.astype(jnp.bfloat16), ((0, Mp - M), (0, Kp - K)))
    operands = [a_p, w_p, b_p]
    if in_affine is not None:
        s, t = in_affine
        operands.append(jnp.pad(s.astype(jnp.float32), (0, Kp - K)).reshape(1, Kp))
        operands.append(jnp.pad(t.astype(jnp.float32), (0, Kp - K)).reshape(1, Kp))

    if n_k == 1:
        a_spec = pl.BlockSpec((tm, Kp), lambda i, j: (i, 0))
        w_spec = pl.BlockSpec((Kp, tn), lambda i, j: (0, j))
        b_spec = pl.BlockSpec((1, tn), lambda i, j: (0, j))
        v_spec = pl.BlockSpec((1, Kp), lambda i, j: (0, 0))
        o_spec = pl.BlockSpec((tm, tn), lambda i, j: (i, j))
        st_spec = pl.BlockSpec((8, tn), lambda i, j: (i, j))
        grid = (gm, gn)
        semantics = ("parallel", "parallel")
        scratch = []
    else:
        a_spec = pl.BlockSpec((tm, tk), lambda i, j, k: (i, k))
        w_spec = pl.BlockSpec((tk, tn), lambda i, j, k: (k, j))
        b_spec = pl.BlockSpec((1, tn), lambda i, j, k: (0, j))
        v_spec = pl.BlockSpec((1, tk), lambda i, j, k: (0, k))
        o_spec = pl.BlockSpec((tm, tn), lambda i, j, k: (i, j))
        st_spec = pl.BlockSpec((8, tn), lambda i, j, k: (i, j))
        grid = (gm, gn, n_k)
        semantics = ("parallel", "parallel", "arbitrary")
        scratch = [pltpu.VMEM((tm, tn), jnp.float32)]

    in_specs = [a_spec, w_spec, b_spec]
    if in_affine is not None:
        in_specs += [v_spec, v_spec]

    o_struct = jax.ShapeDtypeStruct((Mp, Np), out_dtype)
    st_struct = jax.ShapeDtypeStruct((gm * 8, Np), jnp.float32)
    if emit_stats:
        out_shape = (o_struct, st_struct, st_struct)
        out_specs = (o_spec, st_spec, st_spec)
    else:
        out_shape = o_struct
        out_specs = o_spec

    kern = partial(_conv_mm_kernel, n_k=n_k, in_affine=in_affine is not None,
                   emit_stats=emit_stats, m_valid=M, tm=tm)
    res = pl.pallas_call(
        kern,
        out_shape=out_shape,
        grid=grid,
        in_specs=in_specs,
        out_specs=out_specs,
        scratch_shapes=scratch,
        compiler_params=pltpu.CompilerParams(
            dimension_semantics=semantics, vmem_limit_bytes=VMEM_LIMIT),
    )(*operands)

    if emit_stats:
        out, ssum, ssq = res
        col_sum = ssum.reshape(gm, 8, Np)[:, 0, :].sum(axis=0)[:n_out]
        col_sq = ssq.reshape(gm, 8, Np)[:, 0, :].sum(axis=0)[:n_out]
        return out[:M, :n_out], col_sum, col_sq
    return res[:M, :n_out]


def _bn_scale_shift(col_sum, col_sq, count, gamma, beta):
    """Training-mode BatchNorm2d scale/shift from in-kernel batch sums."""
    mean = col_sum / count
    var = jnp.maximum(col_sq / count - mean * mean, 0.0)
    scale = gamma * lax.rsqrt(var + BN_EPS)
    shift = beta - mean * scale
    return scale, shift


# ---------------------------------------------------------------------------
# NN building blocks (NHWC, bf16 activations) — jitted per shape.
# ---------------------------------------------------------------------------
@partial(jax.jit,
         static_argnames=("kh", "kw", "cout", "stride", "padding", "out_dtype"))
def conv2d(x, w_p, b_p, in_affine, bn, *, kh, kw, cout, stride=1, padding=0,
           out_dtype=jnp.bfloat16):
    """x: [N,H,W,Cin]; w_p: packed [Kp,Np] bf16; b_p: [1,Np] f32.

    in_affine: optional per-input-channel (scale, shift); relu(x*s+t) is fused
      into the matmul kernel for 1x1 convs and folded into the im2col prologue
      (XLA fuses it with the pad / patch extraction) for kxk convs.
    bn: optional (gamma, beta) of the BatchNorm that follows this conv; when
      given, batch sums are emitted by the matmul kernel and the resulting
      per-channel (scale, shift) is returned alongside the raw bf16 output.
    """
    N, H, W, cin = x.shape
    fuse_in_kernel = in_affine is not None and kh == 1 and kw == 1 and padding == 0
    if in_affine is not None and not fuse_in_kernel:
        s, t = in_affine
        x = jnp.maximum(x.astype(jnp.float32) * s + t, 0.0)
    x = x.astype(jnp.bfloat16)
    if padding:
        x = jnp.pad(x, ((0, 0), (padding, padding), (padding, padding), (0, 0)))
    Hp, Wp = x.shape[1], x.shape[2]
    Ho = (Hp - kh) // stride + 1
    Wo = (Wp - kw) // stride + 1
    if kh == 1 and kw == 1:
        a = x[:, 0:stride * Ho:stride, 0:stride * Wo:stride, :].reshape(
            N * Ho * Wo, cin)
    else:
        # TODO(synk): im2col still materializes kh*kw shifted copies in HBM; a
        # tap-wise K-grid (halo-aware direct conv) would remove this blowup.
        cols = [x[:, i:i + stride * Ho:stride, j:j + stride * Wo:stride, :]
                for i in range(kh) for j in range(kw)]
        a = jnp.concatenate(cols, axis=-1).reshape(N * Ho * Wo, kh * kw * cin)
    res = conv_matmul(a, w_p, b_p, cout,
                      in_affine=in_affine if fuse_in_kernel else None,
                      emit_stats=bn is not None, out_dtype=out_dtype)
    if bn is not None:
        out, col_sum, col_sq = res
        gamma, beta = bn
        scale, shift = _bn_scale_shift(col_sum, col_sq, float(N * Ho * Wo),
                                       gamma, beta)
        return out.reshape(N, Ho, Wo, cout), scale, shift
    return res.reshape(N, Ho, Wo, cout)


@jax.jit
def bn_add_relu(y, s, t, r, rs, rt):
    """relu(s*y + t + rs*r + rt): fused bottleneck tail (bn3 [+ downsample bn]
    + residual add + ReLU) in one HBM pass, bf16 in / bf16 out."""
    N, H, W, C = y.shape
    M = N * H * W
    Mp, Cp, tm = _ew_tiles(M, C)

    def pm(a):
        return jnp.pad(a.astype(jnp.bfloat16).reshape(M, C),
                       ((0, Mp - M), (0, Cp - C)))

    def pv(a):
        return jnp.pad(a.astype(jnp.float32), (0, Cp - C)).reshape(1, Cp)

    row = pl.BlockSpec((tm, Cp), lambda i: (i, 0))
    vec = pl.BlockSpec((1, Cp), lambda i: (0, 0))
    out = pl.pallas_call(
        _bn_add_relu_kernel,
        out_shape=jax.ShapeDtypeStruct((Mp, Cp), jnp.bfloat16),
        grid=(Mp // tm,),
        in_specs=[row, vec, vec, row, vec, vec],
        out_specs=row,
        compiler_params=pltpu.CompilerParams(
            dimension_semantics=("parallel",),
            vmem_limit_bytes=VMEM_LIMIT),
    )(pm(y), pv(s), pv(t), pm(r), pv(rs), pv(rt))
    return out[:M, :C].reshape(N, H, W, C)


@jax.jit
def maxpool2d_act(x, scale, shift):
    """3x3 / stride-2 / pad-1 max pool of relu(scale*x + shift) (encoder bn1)."""
    k, stride, pad = 3, 2, 1
    N, H, W, C = x.shape
    x = jnp.maximum(x.astype(jnp.float32) * scale + shift, 0.0).astype(jnp.bfloat16)
    neg = float(jnp.finfo(jnp.bfloat16).min)
    # TODO(synk): the 9 shifted window slabs are still materialized in HBM; a
    # windowed single-read Pallas kernel would cut this to one read.
    x_p = jnp.pad(x, ((0, 0), (pad, pad), (pad, pad), (0, 0)),
                  constant_values=neg)
    Hp, Wp = x_p.shape[1], x_p.shape[2]
    Ho = (Hp - k) // stride + 1
    Wo = (Wp - k) // stride + 1
    M = N * Ho * Wo
    Mp, Cp, tm = _ew_tiles(M, C)
    slabs = []
    for i in range(k):
        for j in range(k):
            s = x_p[:, i:i + stride * Ho:stride, j:j + stride * Wo:stride, :]
            slabs.append(jnp.pad(s.reshape(M, C), ((0, Mp - M), (0, Cp - C)),
                                 constant_values=neg))
    out = pl.pallas_call(
        _max9_kernel,
        out_shape=jax.ShapeDtypeStruct((Mp, Cp), jnp.bfloat16),
        grid=(Mp // tm,),
        in_specs=[pl.BlockSpec((tm, Cp), lambda i: (i, 0))] * (k * k),
        out_specs=pl.BlockSpec((tm, Cp), lambda i: (i, 0)),
        compiler_params=pltpu.CompilerParams(
            dimension_semantics=("parallel",),
            vmem_limit_bytes=VMEM_LIMIT),
    )(*slabs)
    return out[:M, :C].reshape(N, Ho, Wo, C)


@jax.jit
def upsample2x_act(x, in_affine):
    """Optional relu(x*s+t) (the pending decoder bn2) fused with an exact 2x
    bilinear (align_corners=False) upsample; bf16 output."""
    if in_affine is not None:
        s, t = in_affine
        x = jnp.maximum(x.astype(jnp.float32) * s + t, 0.0)
    else:
        x = x.astype(jnp.float32)

    # TODO(synk): upsample stays as XLA shift/interleave glue; folding the fixed
    # bilinear taps into the following 3x3 conv would remove this extra pass.
    def up_axis(a, axis):
        n = a.shape[axis]
        prev = jnp.concatenate([lax.slice_in_dim(a, 0, 1, axis=axis),
                                lax.slice_in_dim(a, 0, n - 1, axis=axis)],
                               axis=axis)
        nxt = jnp.concatenate([lax.slice_in_dim(a, 1, n, axis=axis),
                               lax.slice_in_dim(a, n - 1, n, axis=axis)],
                              axis=axis)
        even = 0.25 * prev + 0.75 * a
        odd = 0.75 * a + 0.25 * nxt
        out = jnp.stack([even, odd], axis=axis + 1)
        shape = list(a.shape)
        shape[axis] = 2 * n
        return out.reshape(shape)

    x = up_axis(x, 1)
    x = up_axis(x, 2)
    return x.astype(jnp.bfloat16)


# ---------------------------------------------------------------------------
# Model composition
# ---------------------------------------------------------------------------
def bottleneck(x, p, planes, stride):
    y, s1, t1 = conv2d(x, p["conv1"]["w"], p["conv1"]["b"], None,
                       (p["bn1"]["gamma"], p["bn1"]["beta"]),
                       kh=1, kw=1, cout=planes)
    y, s2, t2 = conv2d(y, p["conv2"]["w"], p["conv2"]["b"], (s1, t1),
                       (p["bn2"]["gamma"], p["bn2"]["beta"]),
                       kh=3, kw=3, cout=planes, stride=stride, padding=1)
    y, s3, t3 = conv2d(y, p["conv3"]["w"], p["conv3"]["b"], (s2, t2),
                       (p["bn3"]["gamma"], p["bn3"]["beta"]),
                       kh=1, kw=1, cout=planes * 4)
    if "down_conv" in p:
        idn, sd, td = conv2d(x, p["down_conv"]["w"], p["down_conv"]["b"], None,
                             (p["down_bn"]["gamma"], p["down_bn"]["beta"]),
                             kh=1, kw=1, cout=planes * 4, stride=stride)
        return bn_add_relu(y, s3, t3, idn, sd, td)
    return bn_add_relu(y, s3, t3, x, jnp.ones_like(s3), jnp.zeros_like(t3))


def decoder_block(x, in_affine, p, cout):
    x = upsample2x_act(x, in_affine)
    y, s1, t1 = conv2d(x, p["conv1"]["w"], p["conv1"]["b"], None,
                       (p["bn1"]["gamma"], p["bn1"]["beta"]),
                       kh=3, kw=3, cout=cout, stride=1, padding=1)
    y, s2, t2 = conv2d(y, p["conv2"]["w"], p["conv2"]["b"], (s1, t1),
                       (p["bn2"]["gamma"], p["bn2"]["beta"]),
                       kh=3, kw=3, cout=cout, stride=1, padding=1)
    return y, (s2, t2)


def resnet_unet_forward(params, x_nchw):
    x = jnp.transpose(x_nchw, (0, 2, 3, 1)).astype(jnp.bfloat16)  # NCHW -> NHWC
    # encoder stem: conv1 / bn1 / relu / maxpool (bn1+relu folded into the pool)
    x, s, t = conv2d(x, params["conv1"]["w"], params["conv1"]["b"], None,
                     (params["bn1"]["gamma"], params["bn1"]["beta"]),
                     kh=7, kw=7, cout=64, stride=2, padding=3)
    x = maxpool2d_act(x, s, t)
    for li, (planes, n_blocks, stride) in enumerate(LAYER_CFG):
        for bi in range(n_blocks):
            x = bottleneck(x, params["layers"][li][bi], planes,
                           stride if bi == 0 else 1)
    aff = None
    for di, (_, cout) in enumerate(DEC_CFG):
        x, aff = decoder_block(x, aff, params["decoder"][di], cout)
    x = conv2d(x, params["head"]["w"], params["head"]["b"], aff, None,
               kh=3, kw=3, cout=NUM_CLASSES, stride=1, padding=1,
               out_dtype=jnp.float32)
    return jnp.transpose(x, (0, 3, 1, 2))                          # NHWC -> NCHW


# ---------------------------------------------------------------------------
# Deterministic parameter init (random, not a checkpoint) + weight pre-packing
# ---------------------------------------------------------------------------
def _pack_conv(w, b):
    """HWIO f32 weight -> padded [Kp, Np] bf16 matrix + padded [1, Np] bias."""
    kh, kw, cin, cout = w.shape
    K = kh * kw * cin
    Kp = _round_up(K, 128)
    Np = _round_up(cout, 128)
    wm = jnp.pad(w.reshape(K, cout), ((0, Kp - K), (0, Np - cout)))
    bp = jnp.pad(b, (0, Np - cout)).reshape(1, Np).astype(jnp.float32)
    return {"w": wm.astype(jnp.bfloat16), "b": bp}


def _init_conv(key, kh, kw, cin, cout, use_bias):
    k1, k2 = jax.random.split(key)
    std = 1.0 / math.sqrt(kh * kw * cin)
    w = jax.random.normal(k1, (kh, kw, cin, cout), jnp.float32) * std
    b = (jax.random.normal(k2, (cout,), jnp.float32) * 0.01 if use_bias
         else jnp.zeros((cout,), jnp.float32))
    return _pack_conv(w, b)


def _init_bn(key, c):
    k1, k2 = jax.random.split(key)
    return {"gamma": 1.0 + 0.1 * jax.random.normal(k1, (c,), jnp.float32),
            "beta": 0.1 * jax.random.normal(k2, (c,), jnp.float32)}


def build_params(key):
    keys = [key]

    def nk():
        keys[0], sub = jax.random.split(keys[0])
        return sub

    p = {"conv1": _init_conv(nk(), 7, 7, IN_CHANNELS, 64, False),
         "bn1": _init_bn(nk(), 64)}

    in_c = 64
    layers = []
    for planes, n_blocks, stride in LAYER_CFG:
        blocks = []
        for bi in range(n_blocks):
            blk = {"conv1": _init_conv(nk(), 1, 1, in_c, planes, False),
                   "bn1": _init_bn(nk(), planes),
                   "conv2": _init_conv(nk(), 3, 3, planes, planes, False),
                   "bn2": _init_bn(nk(), planes),
                   "conv3": _init_conv(nk(), 1, 1, planes, planes * 4, False),
                   "bn3": _init_bn(nk(), planes * 4)}
            if bi == 0:
                blk["down_conv"] = _init_conv(nk(), 1, 1, in_c, planes * 4,
                                              False)
                blk["down_bn"] = _init_bn(nk(), planes * 4)
            blocks.append(blk)
            in_c = planes * 4
        layers.append(blocks)
    p["layers"] = layers

    dec = []
    for cin, cout in DEC_CFG:
        dec.append({"conv1": _init_conv(nk(), 3, 3, cin, cout, True),
                    "bn1": _init_bn(nk(), cout),
                    "conv2": _init_conv(nk(), 3, 3, cout, cout, True),
                    "bn2": _init_bn(nk(), cout)})
    p["decoder"] = dec
    p["head"] = _init_conv(nk(), 3, 3, 16, NUM_CLASSES, True)
    return p


if __name__ == "__main__":
    root = jax.random.PRNGKey(0)
    pkey, xkey = jax.random.split(root)
    params = build_params(pkey)

    # small input consistent with the module (NCHW, like PyTorch)
    x = jax.random.normal(xkey, (2, IN_CHANNELS, 32, 32), jnp.float32)

    out = resnet_unet_forward(params, x)
    out = jax.block_until_ready(out)

    assert out.shape == (2, NUM_CLASSES, 32, 32), out.shape
    assert out.dtype == jnp.float32
    assert bool(jnp.all(jnp.isfinite(out)))
    print("KERNEL_OK")
</pallas_src>

<mosaic_0001>
module attributes {stable_mosaic.version = 11 : i64} {
  func.func @_conv_mm_kernel(%arg0: i32, %arg1: i32, %arg2: memref<256x256xbf16, #tpu.memory_space<vmem>>, %arg3: memref<256x128xbf16, #tpu.memory_space<vmem>>, %arg4: memref<1x128xf32, #tpu.memory_space<vmem>>, %arg5: memref<256x128xbf16, #tpu.memory_space<vmem>>, %arg6: memref<8x128xf32, #tpu.memory_space<vmem>>, %arg7: memref<8x128xf32, #tpu.memory_space<vmem>>) attributes {dimension_semantics = [#tpu.dimension_semantics<parallel>, #tpu.dimension_semantics<parallel>], iteration_bounds = array<i64: 2, 1>, scalar_prefetch = 0 : i64, scratch_operands = 0 : i64, tpu.core_type = #tpu.core_type<tc>, window_params = [{transform_indices = @transform_0, window_bounds = array<i64: 256, 256>}, {transform_indices = @transform_1, window_bounds = array<i64: 256, 128>}, {transform_indices = @transform_2, window_bounds = array<i64: 1, 128>}, {transform_indices = @transform_3, window_bounds = array<i64: 256, 128>}, {transform_indices = @transform_4, window_bounds = array<i64: 8, 128>}, {transform_indices = @transform_5, window_bounds = array<i64: 8, 128>}]} {
    %c0 = arith.constant 0 : index
    %c0_0 = arith.constant 0 : index
    %0 = vector.load %arg2[%c0, %c0_0] : memref<256x256xbf16, #tpu.memory_space<vmem>>, vector<256x256xbf16>
    %c0_1 = arith.constant 0 : index
    %c0_2 = arith.constant 0 : index
    %1 = vector.load %arg3[%c0_1, %c0_2] : memref<256x128xbf16, #tpu.memory_space<vmem>>, vector<256x128xbf16>
    %cst = arith.constant dense<0.000000e+00> : vector<256x128xf32>
    %2 = tpu.matmul %0, %1, %cst {dimension_numbers = #tpu.dot_dimension_numbers<[1], [0], [0], [1], [0, 0, 1, 1], [], []>} : vector<256x256xbf16>, vector<256x128xbf16>, vector<256x128xf32> -> vector<256x128xf32>
    %c0_3 = arith.constant 0 : index
    %c0_4 = arith.constant 0 : index
    %3 = vector.load %arg4[%c0_3, %c0_4] : memref<1x128xf32, #tpu.memory_space<vmem>>, vector<1x128xf32>
    %4 = vector.broadcast %3 : vector<1x128xf32> to vector<256x128xf32>
    %5 = arith.addf %2, %4 : vector<256x128xf32>
    %6 = arith.truncf %5 : vector<256x128xf32> to vector<256x128xbf16>
    %c0_5 = arith.constant 0 : index
    %c0_6 = arith.constant 0 : index
    %7 = vector.load %arg5[%c0_5, %c0_6] : memref<256x128xbf16, #tpu.memory_space<vmem>>, vector<256x128xbf16>
    tpu.vector_store %arg5[%c0_5, %c0_6], %6 {strides = array<i32>} : memref<256x128xbf16, #tpu.memory_space<vmem>>, vector<256x128xbf16>,
    %8 = tpu.iota {dimensions = array<i32: 0>} : vector<256x128xi32>
    %c256_i32 = arith.constant 256 : i32
    %9 = arith.muli %arg0, %c256_i32 : i32
    %10 = vector.broadcast %9 : i32 to vector<256x128xi32>
    %11 = arith.addi %8, %10 : vector<256x128xi32>
    %c512_i32 = arith.constant 512 : i32
    %12 = vector.broadcast %c512_i32 : i32 to vector<256x128xi32>
    %13 = arith.cmpi slt, %11, %12 : vector<256x128xi32>
    %cst_7 = arith.constant 0.000000e+00 : f32
    %14 = vector.broadcast %cst_7 : f32 to vector<256x128xf32>
    %15 = arith.select %13, %5, %14 : vector<256x128xi1>, vector<256x128xf32>
    %cst_8 = arith.constant dense<0.000000e+00> : vector<128xf32>
    %16 = vector.multi_reduction <add>, %15, %cst_8 [0] : vector<256x128xf32> to vector<128xf32>
    %17 = vector.shape_cast %16 : vector<128xf32> to vector<1x128xf32>
    %18 = vector.shape_cast %17 : vector<1x128xf32> to vector<1x128xf32>
    %19 = vector.broadcast %18 : vector<1x128xf32> to vector<8x128xf32>
    %c0_9 = arith.constant 0 : index
    %c0_10 = arith.constant 0 : index
    %20 = vector.load %arg6[%c0_9, %c0_10] : memref<8x128xf32, #tpu.memory_space<vmem>>, vector<8x128xf32>
    tpu.vector_store %arg6[%c0_9, %c0_10], %19 {strides = array<i32>} : memref<8x128xf32, #tpu.memory_space<vmem>>, vector<8x128xf32>,
    %21 = arith.mulf %15, %15 : vector<256x128xf32>
    %cst_11 = arith.constant dense<0.000000e+00> : vector<128xf32>
    %22 = vector.multi_reduction <add>, %21, %cst_11 [0] : vector<256x128xf32> to vector<128xf32>
    %23 = vector.shape_cast %22 : vector<128xf32> to vector<1x128xf32>
    %24 = vector.shape_cast %23 : vector<1x128xf32> to vector<1x128xf32>
    %25 = vector.broadcast %24 : vector<1x128xf32> to vector<8x128xf32>
    %c0_12 = arith.constant 0 : index
    %c0_13 = arith.constant 0 : index
    %26 = vector.load %arg7[%c0_12, %c0_13] : memref<8x128xf32, #tpu.memory_space<vmem>>, vector<8x128xf32>
    tpu.vector_store %arg7[%c0_12, %c0_13], %25 {strides = array<i32>} : memref<8x128xf32, #tpu.memory_space<vmem>>, vector<8x128xf32>,
    return
  }
  func.func @transform_0(%arg0: i32, %arg1: i32) -> (i32, i32) {
    %c0_i32 = arith.constant 0 : i32
    %c0_i32_0 = arith.constant 0 : i32
    return %arg0, %c0_i32 : i32, i32
  }
  func.func @transform_1(%arg0: i32, %arg1: i32) -> (i32, i32) {
    %c0_i32 = arith.constant 0 : i32
    %c0_i32_0 = arith.constant 0 : i32
    return %c0_i32, %arg1 : i32, i32
  }
  func.func @transform_2(%arg0: i32, %arg1: i32) -> (i32, i32) {
    %c0_i32 = arith.constant 0 : i32
    %c0_i32_0 = arith.constant 0 : i32
    return %c0_i32, %arg1 : i32, i32
  }
  func.func @transform_3(%arg0: i32, %arg1: i32) -> (i32, i32) {
    %c0_i32 = arith.constant 0 : i32
    return %arg0, %arg1 : i32, i32
  }
  func.func @transform_4(%arg0: i32, %arg1: i32) -> (i32, i32) {
    %c0_i32 = arith.constant 0 : i32
    return %arg0, %arg1 : i32, i32
  }
  func.func @transform_5(%arg0: i32, %arg1: i32) -> (i32, i32) {
    %c0_i32 = arith.constant 0 : i32
    return %arg0, %arg1 : i32, i32
  }
}

</mosaic_0001>

<llo_original>
// kernel: conv2d.1
$region0: #{conv2d.1}
  #allocation0 [shape = 'u32[]', space=smem, size = 0x4, offset = 0x4, fixed_abs, tag = 'smem constant byte address 0x4 - core index']
  #allocation1 [shape = 'u32[144,128]{1,0:T(1,128)}', space=vmem, size = 0x12000, scoped, tag = 'internal scratch']
  %s0 = inlined_call_operand.vmem [shape: bf16[512,256], index: 0, kind: input, shape index: {}]
  %s1 = inlined_call_operand.vmem [shape: bf16[256,128], index: 1, kind: input, shape index: {}]
  %s2 = inlined_call_operand.vmem [shape: f32[1,128], index: 2, kind: input, shape index: {}]
  %s3 = inlined_call_operand.hbm [shape: bf16[512,128], index: 3, kind: output, shape index: {0}]
  %s4 = inlined_call_operand.vmem [shape: f32[16,128], index: 4, kind: output, shape index: {1}]
  %s5 = inlined_call_operand.vmem [shape: f32[16,128], index: 5, kind: output, shape index: {2}]
  %6 = xla_tuple %s3, %s4, %s5
  %s7 = sld [smem:[#allocation0]]
  $region61: #{conv2d.1} parent=0
    _
  %s9 = ssub.s32 1, %s7
  %s10 = scalar_select 0, %s9, %s7
  $region1: #{conv2d.1} parent=0
    #allocation2 [shape = 'u8[131072]{0}', space=vmem, size = 0x20000, scoped, tag = 'output window, operand 0']
    #allocation3 [shape = 's32[2]{0}', space=sflag, size = 0x8, scoped, tag = 'scoped memory for conv2d.1']
    %11 = vsyncpa [#allocation3], 0
    %s12 = scalar_lea.sflag [#allocation3], 1
    %13 = vsyncpa %s12, 0
    loop: start=0, step=1, limit=4
    $region2: #{conv2d.1} parent=1 // loop_pre_header
      _
    $region3: #{conv2d.1} parent=1 // loop_header
      %s15 = sphi 0, %s19
      %p16 = scmp.ge.s32.totalorder %s15, 4
      %s22 = sphi 0, %s34
      %s23 = sphi 0, %s30
      %s24 = sphi 0, %s22
      %s25 = sphi 0, %s23
      %s26 = sphi 0, %s24
      %s27 = sphi 0, %s25
      %s37 = sphi 0, %s39
      %s40 = sphi 0, %s37
      %s41 = sphi 0, %s40
      %s57 = sphi 0, %s41
      %s63 = sphi 0, %s65
      %s66 = sphi 0, %s63
      %s67 = sphi 0, %s66
      %s83 = sphi 0, %s67
      %s89 = sphi 0, %s91
      %s92 = sphi 0, %s89
      %s93 = sphi 0, %s92
      %s109 = sphi 0, %s93
      %s117 = sphi 0, %s119
      %s120 = sphi 0, %s117
      %s121 = sphi 0, %s120
      %s137 = sphi 0, %s121
      %s145 = sphi 0, %s147
      %s148 = sphi 0, %s145
      %s149 = sphi 0, %s148
      %s165 = sphi 0, %s149
      %s173 = sphi 0, %s175
      %s176 = sphi 0, %s173
      %s177 = sphi 0, %s176
      %s193 = sphi 0, %s177
    $region4: #{conv2d.1} parent=1 // loop_header_branch
      %18 = sbr.rel (%p16) target = $region8
    $region5: #{conv2d.1} parent=1 // loop_body
      %s20 = ssub.s32 %s15, 1
      %s21 = ssub.s32 %s15, 2
      %s28 = sadd.s32 1, %s23
      %p29 = scmp.ge.s32.totalorder %s28, 1
      %s30 = scalar_select %p29, 0, %s28
      %s31 = sadd.s32 1, %s22
      %s32 = scalar_select %p29, %s31, %s22
      %p33 = scmp.ge.s32.totalorder %s32, 2
      %s34 = scalar_select %p33, 0, %s32
      %s35 = ssub.s32 %s22, %s34
      %p36 = scmp.eq.s32.totalorder %s35, 0
      %s38 = sadd.s32 %s37, 1
      %s39 = scalar_select %p36, %s37, %s38
      %p42 = pneg %p36
      %p43 = scmp.eq.s32.totalorder %s15, 1
      %p44 = por %p42, %p43
      %p45 = scmp.ne.s32.totalorder %s37, %s40
      %p46 = scmp.eq.s32.totalorder %s15, 0
      %p47 = por %p45, %p46
      %p48 = scmp.ne.s32.totalorder %s37, %s40
      %p49 = scmp.eq.s32.totalorder %s20, 1
      %p50 = por %p48, %p49
      %p51 = scmp.ne.s32.totalorder %s40, %s41
      %p52 = scmp.eq.s32.totalorder %s20, 0
      %p53 = por %p51, %p52
      %p54 = scmp.ne.s32.totalorder %s40, %s41
      %p55 = scmp.eq.s32.totalorder %s21, 1
      %p56 = por %p54, %p55
      %p58 = scmp.ne.s32.totalorder %s41, %s57
      %p59 = scmp.eq.s32.totalorder %s21, 0
      %p60 = por %p58, %p59
      %s61 = ssub.s32 %s23, %s30
      %p62 = scmp.eq.s32.totalorder %s61, 0
      %s64 = sadd.s32 %s63, 1
      %s65 = scalar_select %p62, %s63, %s64
      %p68 = pneg %p62
      %p69 = scmp.eq.s32.totalorder %s15, 1
      %p70 = por %p68, %p69
      %p71 = scmp.ne.s32.totalorder %s63, %s66
      %p72 = scmp.eq.s32.totalorder %s15, 0
      %p73 = por %p71, %p72
      %p74 = scmp.ne.s32.totalorder %s63, %s66
      %p75 = scmp.eq.s32.totalorder %s20, 1
      %p76 = por %p74, %p75
      %p77 = scmp.ne.s32.totalorder %s66, %s67
      %p78 = scmp.eq.s32.totalorder %s20, 0
      %p79 = por %p77, %p78
      %p80 = scmp.ne.s32.totalorder %s66, %s67
      %p81 = scmp.eq.s32.totalorder %s21, 1
      %p82 = por %p80, %p81
      %p84 = scmp.ne.s32.totalorder %s67, %s83
      %p85 = scmp.eq.s32.totalorder %s21, 0
      %p86 = por %p84, %p85
      %s87 = ssub.s32 %s23, %s30
      %p88 = scmp.eq.s32.totalorder %s87, 0
      %s90 = sadd.s32 %s89, 1
      %s91 = scalar_select %p88, %s89, %s90
      %p94 = pneg %p88
      %p95 = scmp.eq.s32.totalorder %s15, 1
      %p96 = por %p94, %p95
      %p97 = scmp.ne.s32.totalorder %s89, %s92
      %p98 = scmp.eq.s32.totalorder %s15, 0
      %p99 = por %p97, %p98
      %p100 = scmp.ne.s32.totalorder %s89, %s92
      %p101 = scmp.eq.s32.totalorder %s20, 1
      %p102 = por %p100, %p101
      %p103 = scmp.ne.s32.totalorder %s92, %s93
      %p104 = scmp.eq.s32.totalorder %s20, 0
      %p105 = por %p103, %p104
      %p106 = scmp.ne.s32.totalorder %s92, %s93
      %p107 = scmp.eq.s32.totalorder %s21, 1
      %p108 = por %p106, %p107
      %p110 = scmp.ne.s32.totalorder %s93, %s109
      %p111 = scmp.eq.s32.totalorder %s21, 0
      %p112 = por %p110, %p111
      %s113 = ssub.s32 %s22, %s34
      %s114 = ssub.s32 %s23, %s30
      %s115 = sor.u32 %s113, %s114
      %p116 = scmp.eq.s32.totalorder %s115, 0
      %s118 = sadd.s32 %s117, 1
      %s119 = scalar_select %p116, %s117, %s118
      %p122 = pneg %p116
      %p123 = scmp.eq.s32.totalorder %s15, 1
      %p124 = por %p122, %p123
      %p125 = scmp.ne.s32.totalorder %s117, %s120
      %p126 = scmp.eq.s32.totalorder %s15, 0
      %p127 = por %p125, %p126
      %p128 = scmp.ne.s32.totalorder %s117, %s120
      %p129 = scmp.eq.s32.totalorder %s20, 1
      %p130 = por %p128, %p129
      %p131 = scmp.ne.s32.totalorder %s120, %s121
      %p132 = scmp.eq.s32.totalorder %s20, 0
      %p133 = por %p131, %p132
      %p134 = scmp.ne.s32.totalorder %s120, %s121
      %p135 = scmp.eq.s32.totalorder %s21, 1
      %p136 = por %p134, %p135
      %p138 = scmp.ne.s32.totalorder %s121, %s137
      %p139 = scmp.eq.s32.totalorder %s21, 0
      %p140 = por %p138, %p139
      %s141 = ssub.s32 %s22, %s34
      %s142 = ssub.s32 %s23, %s30
      %s143 = sor.u32 %s141, %s142
      %p144 = scmp.eq.s32.totalorder %s143, 0
      %s146 = sadd.s32 %s145, 1
      %s147 = scalar_select %p144, %s145, %s146
      %p150 = pneg %p144
      %p151 = scmp.eq.s32.totalorder %s15, 1
      %p152 = por %p150, %p151
      %p153 = scmp.ne.s32.totalorder %s145, %s148
      %p154 = scmp.eq.s32.totalorder %s15, 0
      %p155 = por %p153, %p154
      %p156 = scmp.ne.s32.totalorder %s145, %s148
      %p157 = scmp.eq.s32.totalorder %s20, 1
      %p158 = por %p156, %p157
      %p159 = scmp.ne.s32.totalorder %s148, %s149
      %p160 = scmp.eq.s32.totalorder %s20, 0
      %p161 = por %p159, %p160
      %p162 = scmp.ne.s32.totalorder %s148, %s149
      %p163 = scmp.eq.s32.totalorder %s21, 1
      %p164 = por %p162, %p163
      %p166 = scmp.ne.s32.totalorder %s149, %s165
      %p167 = scmp.eq.s32.totalorder %s21, 0
      %p168 = por %p166, %p167
      %s169 = ssub.s32 %s22, %s34
      %s170 = ssub.s32 %s23, %s30
      %s171 = sor.u32 %s169, %s170
      %p172 = scmp.eq.s32.totalorder %s171, 0
      %s174 = sadd.s32 %s173, 1
      %s175 = scalar_select %p172, %s173, %s174
      %p178 = pneg %p172
      %p179 = scmp.eq.s32.totalorder %s15, 1
      %p180 = por %p178, %p179
      %p181 = scmp.ne.s32.totalorder %s173, %s176
      %p182 = scmp.eq.s32.totalorder %s15, 0
      %p183 = por %p181, %p182
      %p184 = scmp.ne.s32.totalorder %s173, %s176
      %p185 = scmp.eq.s32.totalorder %s20, 1
      %p186 = por %p184, %p185
      %p187 = scmp.ne.s32.totalorder %s176, %s177
      %p188 = scmp.eq.s32.totalorder %s20, 0
      %p189 = por %p187, %p188
      %p190 = scmp.ne.s32.totalorder %s176, %s177
      %p191 = scmp.eq.s32.totalorder %s21, 1
      %p192 = por %p190, %p191
      %p194 = scmp.ne.s32.totalorder %s177, %s193
      %p195 = scmp.eq.s32.totalorder %s21, 0
      %p196 = por %p194, %p195
      %p197 = scmp.le.s32.totalorder 1, %s15
      %p198 = scmp.lt.s32.totalorder %s15, 3
      %p199 = pnand %p197, %p198
      %p200 = pneg %p199
      // Predicated region
      $region9: #{conv2d.1} parent=5 // pred_check
        _
      $region10: #{conv2d.1} parent=5 // pred_check_branch
        %202 = sbr.rel (%p199) target = $region12
      $region11: #{conv2d.1} parent=5 // pred_region
        %s203 = ssub.s32 %s15, 1
        // Predicated region
        $region13: #{conv2d.1} parent=11 // pred_check
          %p204 = pneg %p79
        $region14: #{conv2d.1} parent=11 // pred_check_branch
          %206 = sbr.rel (%p204) target = $region16
        $region15: #{conv2d.1} parent=11 // pred_region
          %p207 = scmp.lt.s32.totalorder %s25, 0
          %s208 = scalar_select %p207, %s25, 0
          %s209 = smul.addr %s208, 4
          %s210 = scalar_lea.vmem %s1, %s209
        $region16: #{conv2d.1} parent=11 // pred_fallthru
          _
        // Predicated region
        $region17: #{conv2d.1} parent=11 // pred_check
          %p211 = pneg %p105
        $region18: #{conv2d.1} parent=11 // pred_check_branch
          %213 = sbr.rel (%p211) target = $region20
        $region19: #{conv2d.1} parent=11 // pred_region
          %p214 = scmp.lt.s32.totalorder %s25, 0
          %s215 = scalar_select %p214, %s25, 0
          %s216 = scalar_lea.vmem %s2, %s215
        $region20: #{conv2d.1} parent=11 // pred_fallthru
          _
      $region12: #{conv2d.1} parent=5 // pred_fallthru
        _
      %p217 = scmp.lt.s32.totalorder %s15, 2
      // Predicated region
      $region21: #{conv2d.1} parent=5 // pred_check
        %p218 = pneg %p217
      $region22: #{conv2d.1} parent=5 // pred_check_branch
        %220 = sbr.rel (%p218) target = $region24
      $region23: #{conv2d.1} parent=5 // pred_region
        // Predicated region
        $region25: #{conv2d.1} parent=23 // pred_check
          %p221 = pneg %p47
        $region26: #{conv2d.1} parent=23 // pred_check_branch
          %223 = sbr.rel (%p221) target = $region28
        $region27: #{conv2d.1} parent=23 // pred_region
          %s224 = smul.u32 32, %s22
          %p225 = scmp.lt.s32.totalorder %s224, 63
          %s226 = scalar_select %p225, %s224, 63
          %s227 = smul.addr %s226, 2
          %s228 = smul.addr %s227, 4
          %s229 = scalar_lea.vmem %s0, %s228
          %s230 = smul.u32 32, %s22
        $region28: #{conv2d.1} parent=23 // pred_fallthru
          _
      $region24: #{conv2d.1} parent=5 // pred_fallthru
        _
      %p231 = scmp.le.s32.totalorder 1, %s15
      %p232 = scmp.lt.s32.totalorder %s15, 3
      %p233 = pnand %p231, %p232
      %p234 = pneg %p233
      // Predicated region
      $region29: #{conv2d.1} parent=5 // pred_check
        _
      $region30: #{conv2d.1} parent=5 // pred_check_branch
        %236 = sbr.rel (%p233) target = $region32
      $region31: #{conv2d.1} parent=5 // pred_region
        %s237 = ssub.s32 %s15, 1
        %s238 = smul.u32 32, %s24
        %p239 = scmp.lt.s32.totalorder %s238, 63
        %s240 = scalar_select %p239, %s238, 63
        %s241 = smul.addr %s240, 2
        %s242 = smul.addr %s241, 4
        %s243 = scalar_lea.vmem %s0, %s242
        %p244 = pneg %p53
        %p245 = pneg %p50
        %p246 = scmp.lt.s32.totalorder %s25, 0
        %s247 = scalar_select %p246, %s25, 0
        %s248 = smul.addr %s247, 4
        %s249 = scalar_lea.vmem %s1, %s248
        %p250 = pneg %p79
        %p251 = pneg %p76
        %p252 = scmp.lt.s32.totalorder %s25, 0
        %s253 = scalar_select %p252, %s25, 0
        %s254 = scalar_lea.vmem %s2, %s253
        %p255 = pneg %p105
        %p256 = pneg %p102
        %p257 = pneg %p133
        %p258 = pneg %p130
        %s259 = sand.u32 %s120, 1
        %s260 = scalar_lea.sflag [#allocation3], %s259
        %s261 = sand.u32 %s120, 1
        %s262 = smul.addr %s261, 128
        %s263 = scalar_lea.vmem [#allocation2], %s262
        %p264 = pneg %p161
        %p265 = pneg %p158
        %p266 = scmp.lt.s32.totalorder %s24, 1
        %s267 = scalar_select %p266, %s24, 1
        %p268 = scmp.lt.s32.totalorder %s25, 0
        %s269 = scalar_select %p268, %s25, 0
        %s270 = sadd.s32 %s269, %s267
        %s271 = smul.addr %s270, 8
        %s272 = scalar_lea.vmem %s4, %s271
        %p273 = pneg %p189
        %p274 = pneg %p186
        %p275 = scmp.lt.s32.totalorder %s24, 1
        %s276 = scalar_select %p275, %s24, 1
        %p277 = scmp.lt.s32.totalorder %s25, 0
        %s278 = scalar_select %p277, %s25, 0
        %s279 = sadd.s32 %s278, %s276
        %s280 = smul.addr %s279, 8
        %s281 = scalar_lea.vmem %s5, %s280
        %s282 = smul.u32 32, %s24
        %p283 = scmp.lt.s32.totalorder %s282, 63
        %s284 = scalar_select %p283, %s282, 63
        %s285 = smul.addr %s284, 2
        %s286 = smul.addr %s285, 4
        %s287 = scalar_lea.vmem %s0, %s286
        %s288 = smul.u32 32, %s24
        %p289 = scmp.lt.s32.totalorder %s25, 0
        %s290 = scalar_select %p289, %s25, 0
        %s291 = smul.addr %s290, 4
        %s292 = scalar_lea.vmem %s1, %s291
        %p293 = scmp.lt.s32.totalorder %s25, 0
        %s294 = scalar_select %p293, %s25, 0
        %s295 = scalar_lea.vmem %s2, %s294
        %s296 = smul.u32 32, %s24
        %p297 = scmp.lt.s32.totalorder %s24, 1
        %s298 = scalar_select %p297, %s24, 1
        %p299 = scmp.lt.s32.totalorder %s25, 0
        %s300 = scalar_select %p299, %s25, 0
        %s301 = sadd.s32 %s300, %s298
        %s302 = smul.addr %s301, 8
        %s303 = scalar_lea.vmem %s4, %s302
        %p304 = scmp.lt.s32.totalorder %s24, 1
        %s305 = scalar_select %p304, %s24, 1
        %p306 = scmp.lt.s32.totalorder %s25, 0
        %s307 = scalar_select %p306, %s25, 0
        %s308 = sadd.s32 %s307, %s305
        %s309 = smul.addr %s308, 8
        %s310 = scalar_lea.vmem %s5, %s309
        %v312 = vld [vmem:[%s287] sm:$0xff]
        %v313 = vld [vmem:[%s287 + $0x8] sm:$0xff]
        %v314 = vld [vmem:[%s287 + $0x10] sm:$0xff]
        %v315 = vld [vmem:[%s287 + $0x18] sm:$0xff]
        %v316 = vld [vmem:[%s287 + $0x20] sm:$0xff]
        %v317 = vld [vmem:[%s287 + $0x28] sm:$0xff]
        %v318 = vld [vmem:[%s287 + $0x30] sm:$0xff]
        %v319 = vld [vmem:[%s287 + $0x38] sm:$0xff]
        %v320 = vld [vmem:[%s287 + $0x40] sm:$0xff]
        %v321 = vld [vmem:[%s287 + $0x48] sm:$0xff]
        %v322 = vld [vmem:[%s287 + $0x50] sm:$0xff]
        %v323 = vld [vmem:[%s287 + $0x58] sm:$0xff]
        %v324 = vld [vmem:[%s287 + $0x60] sm:$0xff]
        %v325 = vld [vmem:[%s287 + $0x68] sm:$0xff]
        %v326 = vld [vmem:[%s287 + $0x70] sm:$0xff]
        %v327 = vld [vmem:[%s287 + $0x78] sm:$0xff]
        %v328 = vld [vmem:[%s287 + $0x80] sm:$0xff]
        %v329 = vld [vmem:[%s287 + $0x88] sm:$0xff]
        %v330 = vld [vmem:[%s287 + $0x90] sm:$0xff]
        %v331 = vld [vmem:[%s287 + $0x98] sm:$0xff]
        %v332 = vld [vmem:[%s287 + $0xa0] sm:$0xff]
        %v333 = vld [vmem:[%s287 + $0xa8] sm:$0xff]
        %v334 = vld [vmem:[%s287 + $0xb0] sm:$0xff]
        %v335 = vld [vmem:[%s287 + $0xb8] sm:$0xff]
        %v336 = vld [vmem:[%s287 + $0xc0] sm:$0xff]
        %v337 = vld [vmem:[%s287 + $0xc8] sm:$0xff]
        %v338 = vld [vmem:[%s287 + $0xd0] sm:$0xff]
        %v339 = vld [vmem:[%s287 + $0xd8] sm:$0xff]
        %v340 = vld [vmem:[%s287 + $0xe0] sm:$0xff]
        %v341 = vld [vmem:[%s287 + $0xe8] sm:$0xff]
        %v342 = vld [vmem:[%s287 + $0xf0] sm:$0xff]
        %v343 = vld [vmem:[%s287 + $0xf8] sm:$0xff]
        %v344 = vld [vmem:[%s292] sm:$0xf]
        %v345 = vld [vmem:[%s292 + $0x4] sm:$0xf]
        %v346 = vld [vmem:[%s292 + $0x8] sm:$0xf]
        %v347 = vld [vmem:[%s292 + $0xc] sm:$0xf]
        %v348 = vld [vmem:[%s292 + $0x10] sm:$0xf]
        %v349 = vld [vmem:[%s292 + $0x14] sm:$0xf]
        %v350 = vld [vmem:[%s292 + $0x18] sm:$0xf]
        %v351 = vld [vmem:[%s292 + $0x1c] sm:$0xf]
        %v352 = vld [vmem:[%s292 + $0x20] sm:$0xf]
        %v353 = vld [vmem:[%s292 + $0x24] sm:$0xf]
        %v354 = vld [vmem:[%s292 + $0x28] sm:$0xf]
        %v355 = vld [vmem:[%s292 + $0x2c] sm:$0xf]
        %v356 = vld [vmem:[%s292 + $0x30] sm:$0xf]
        %v357 = vld [vmem:[%s292 + $0x34] sm:$0xf]
        %v358 = vld [vmem:[%s292 + $0x38] sm:$0xf]
        %v359 = vld [vmem:[%s292 + $0x3c] sm:$0xf]
        %v360 = vld [vmem:[%s292 + $0x40] sm:$0xf]
        %v361 = vld [vmem:[%s292 + $0x44] sm:$0xf]
        %v362 = vld [vmem:[%s292 + $0x48] sm:$0xf]
        %v363 = vld [vmem:[%s292 + $0x4c] sm:$0xf]
        %v364 = vld [vmem:[%s292 + $0x50] sm:$0xf]
        %v365 = vld [vmem:[%s292 + $0x54] sm:$0xf]
        %v366 = vld [vmem:[%s292 + $0x58] sm:$0xf]
        %v367 = vld [vmem:[%s292 + $0x5c] sm:$0xf]
        %v368 = vld [vmem:[%s292 + $0x60] sm:$0xf]
        %v369 = vld [vmem:[%s292 + $0x64] sm:$0xf]
        %v370 = vld [vmem:[%s292 + $0x68] sm:$0xf]
        %v371 = vld [vmem:[%s292 + $0x6c] sm:$0xf]
        %v372 = vld [vmem:[%s292 + $0x70] sm:$0xf]
        %v373 = vld [vmem:[%s292 + $0x74] sm:$0xf]
        %v374 = vld [vmem:[%s292 + $0x78] sm:$0xf]
        %v375 = vld [vmem:[%s292 + $0x7c] sm:$0xf]
        %v376 = vld [vmem:[%s295] sm:$0x1]
        %v378 = vlaneseq
        %v379 = vshrl.u32 %v378, 7
        %v380 = vsub.s32 0, %v379
        %v381 = vrot.slane %v376, %v380
        %v415 = vunpack.c.l.b16 %v312
        %v416 = vunpack.c.h.b16 %v312
        %v417 = vunpack.c.l.b16 %v313
        %v418 = vunpack.c.h.b16 %v313
        %v419 = vunpack.c.l.b16 %v314
        %v420 = vunpack.c.h.b16 %v314
        %v421 = vunpack.c.l.b16 %v315
        %v422 = vunpack.c.h.b16 %v315
        %v423 = vunpack.c.l.b16 %v316
        %v424 = vunpack.c.h.b16 %v316
        %v425 = vunpack.c.l.b16 %v317
        %v426 = vunpack.c.h.b16 %v317
        %v427 = vunpack.c.l.b16 %v318
        %v428 = vunpack.c.h.b16 %v318
        %v429 = vunpack.c.l.b16 %v319
        %v430 = vunpack.c.h.b16 %v319
        %v431 = vunpack.c.l.b16 %v320
        %v432 = vunpack.c.h.b16 %v320
        %v433 = vunpack.c.l.b16 %v321
        %v434 = vunpack.c.h.b16 %v321
        %v435 = vunpack.c.l.b16 %v322
        %v436 = vunpack.c.h.b16 %v322
        %v437 = vunpack.c.l.b16 %v323
        %v438 = vunpack.c.h.b16 %v323
        %v439 = vunpack.c.l.b16 %v324
        %v440 = vunpack.c.h.b16 %v324
        %v441 = vunpack.c.l.b16 %v325
        %v442 = vunpack.c.h.b16 %v325
        %v443 = vunpack.c.l.b16 %v326
        %v444 = vunpack.c.h.b16 %v326
        %v445 = vunpack.c.l.b16 %v327
        %v446 = vunpack.c.h.b16 %v327
        %v447 = vunpack.c.l.b16 %v328
        %v448 = vunpack.c.h.b16 %v328
        %v449 = vunpack.c.l.b16 %v329
        %v450 = vunpack.c.h.b16 %v329
        %v451 = vunpack.c.l.b16 %v330
        %v452 = vunpack.c.h.b16 %v330
        %v453 = vunpack.c.l.b16 %v331
        %v454 = vunpack.c.h.b16 %v331
        %v455 = vunpack.c.l.b16 %v332
        %v456 = vunpack.c.h.b16 %v332
        %v457 = vunpack.c.l.b16 %v333
        %v458 = vunpack.c.h.b16 %v333
        %v459 = vunpack.c.l.b16 %v334
        %v460 = vunpack.c.h.b16 %v334
        %v461 = vunpack.c.l.b16 %v335
        %v462 = vunpack.c.h.b16 %v335
        %v463 = vunpack.c.l.b16 %v336
        %v464 = vunpack.c.h.b16 %v336
        %v465 = vunpack.c.l.b16 %v337
        %v466 = vunpack.c.h.b16 %v337
        %v467 = vunpack.c.l.b16 %v338
        %v468 = vunpack.c.h.b16 %v338
        %v469 = vunpack.c.l.b16 %v339
        %v470 = vunpack.c.h.b16 %v339
        %v471 = vunpack.c.l.b16 %v340
        %v472 = vunpack.c.h.b16 %v340
        %v473 = vunpack.c.l.b16 %v341
        %v474 = vunpack.c.h.b16 %v341
        %v475 = vunpack.c.l.b16 %v342
        %v476 = vunpack.c.h.b16 %v342
        %v477 = vunpack.c.l.b16 %v343
        %v478 = vunpack.c.h.b16 %v343
        %v479 = vpack.c.b16 %v417, %v415
        %v480 = vpack.c.b16 %v418, %v416
        %v481 = vpack.c.b16 %v421, %v419
        %v482 = vpack.c.b16 %v422, %v420
        %v483 = vpack.c.b16 %v425, %v423
        %v484 = vpack.c.b16 %v426, %v424
        %v485 = vpack.c.b16 %v429, %v427
        %v486 = vpack.c.b16 %v430, %v428
        %v487 = vpack.c.b16 %v433, %v431
        %v488 = vpack.c.b16 %v434, %v432
        %v489 = vpack.c.b16 %v437, %v435
        %v490 = vpack.c.b16 %v438, %v436
        %v491 = vpack.c.b16 %v441, %v439
        %v492 = vpack.c.b16 %v442, %v440
        %v493 = vpack.c.b16 %v445, %v443
        %v494 = vpack.c.b16 %v446, %v444
        %v495 = vpack.c.b16 %v449, %v447
        %v496 = vpack.c.b16 %v450, %v448
        %v497 = vpack.c.b16 %v453, %v451
        %v498 = vpack.c.b16 %v454, %v452
        %v499 = vpack.c.b16 %v457, %v455
        %v500 = vpack.c.b16 %v458, %v456
        %v501 = vpack.c.b16 %v461, %v459
        %v502 = vpack.c.b16 %v462, %v460
        %v503 = vpack.c.b16 %v465, %v463
        %v504 = vpack.c.b16 %v466, %v464
        %v505 = vpack.c.b16 %v469, %v467
        %v506 = vpack.c.b16 %v470, %v468
        %v507 = vpack.c.b16 %v473, %v471
        %v508 = vpack.c.b16 %v474, %v472
        %v509 = vpack.c.b16 %v477, %v475
        %v510 = vpack.c.b16 %v478, %v476
        %v575 = vunpack.c.l.b16 %v344
        %v576 = vunpack.c.l.b16 %v345
        %v577 = vunpack.c.l.b16 %v346
        %v578 = vunpack.c.l.b16 %v347
        %v579 = vunpack.c.l.b16 %v348
        %v580 = vunpack.c.l.b16 %v349
        %v581 = vunpack.c.l.b16 %v350
        %v582 = vunpack.c.l.b16 %v351
        %v583 = vunpack.c.l.b16 %v352
        %v584 = vunpack.c.l.b16 %v353
        %v585 = vunpack.c.l.b16 %v354
        %v586 = vunpack.c.l.b16 %v355
        %v587 = vunpack.c.l.b16 %v356
        %v588 = vunpack.c.l.b16 %v357
        %v589 = vunpack.c.l.b16 %v358
        %v590 = vunpack.c.l.b16 %v359
        %v591 = vunpack.c.l.b16 %v360
        %v592 = vunpack.c.l.b16 %v361
        %v593 = vunpack.c.l.b16 %v362
        %v594 = vunpack.c.l.b16 %v363
        %v595 = vunpack.c.l.b16 %v364
        %v596 = vunpack.c.l.b16 %v365
        %v597 = vunpack.c.l.b16 %v366
        %v598 = vunpack.c.l.b16 %v367
        %v599 = vunpack.c.l.b16 %v368
        %v600 = vunpack.c.l.b16 %v369
        %v601 = vunpack.c.l.b16 %v370
        %v602 = vunpack.c.l.b16 %v371
        %v603 = vunpack.c.l.b16 %v372
        %v604 = vunpack.c.l.b16 %v373
        %v605 = vunpack.c.l.b16 %v374
        %v606 = vunpack.c.l.b16 %v375
        %v607 = vpack.c.b16 %v576, %v575
        %v608 = vpack.c.b16 %v578, %v577
        %v609 = vpack.c.b16 %v580, %v579
        %v610 = vpack.c.b16 %v582, %v581
        %v611 = vpack.c.b16 %v584, %v583
        %v612 = vpack.c.b16 %v586, %v585
        %v613 = vpack.c.b16 %v588, %v587
        %v614 = vpack.c.b16 %v590, %v589
        %v615 = vpack.c.b16 %v592, %v591
        %v616 = vpack.c.b16 %v594, %v593
        %v617 = vpack.c.b16 %v596, %v595
        %v618 = vpack.c.b16 %v598, %v597
        %v619 = vpack.c.b16 %v600, %v599
        %v620 = vpack.c.b16 %v602, %v601
        %v621 = vpack.c.b16 %v604, %v603
        %v622 = vpack.c.b16 %v606, %v605
        %639 = vmatprep.subr.bf16.mxu0 0
        %640 = vmatpush1.bf16.msra.mxu0 %v607
        %641 = vmatprep.subr.bf16.mxu0 0
        %642 = vmatpush1.bf16.msra.mxu0 %v608
        %643 = vmatprep.subr.bf16.mxu0 0
        %644 = vmatpush1.bf16.msra.mxu0 %v609
        %645 = vmatprep.subr.bf16.mxu0 0
        %646 = vmatpush1.bf16.msra.mxu0 %v610
        %647 = vmatprep.subr.bf16.mxu0 0
        %648 = vmatpush1.bf16.msra.mxu0 %v611
        %649 = vmatprep.subr.bf16.mxu0 0
        %650 = vmatpush1.bf16.msra.mxu0 %v612
        %651 = vmatprep.subr.bf16.mxu0 0
        %652 = vmatpush1.bf16.msra.mxu0 %v613
        %653 = vmatprep.subr.bf16.mxu0 0
        %654 = vmatpush1.bf16.msra.mxu0 %v614
        %655 = vmatprep.subr.bf16.mxu0 0
        %656 = vmatpush1.bf16.msra.mxu0 %v615
        %657 = vmatprep.subr.bf16.mxu0 0
        %658 = vmatpush1.bf16.msra.mxu0 %v616
        %659 = vmatprep.subr.bf16.mxu0 0
        %660 = vmatpush1.bf16.msra.mxu0 %v617
        %661 = vmatprep.subr.bf16.mxu0 0
        %662 = vmatpush1.bf16.msra.mxu0 %v618
        %663 = vmatprep.subr.bf16.mxu0 0
        %664 = vmatpush1.bf16.msra.mxu0 %v619
        %665 = vmatprep.subr.bf16.mxu0 0
        %666 = vmatpush1.bf16.msra.mxu0 %v620
        %667 = vmatprep.subr.bf16.mxu0 0
        %668 = vmatpush1.bf16.msra.mxu0 %v621
        %669 = vmatprep.subr.bf16.mxu0 0
        %670 = vmatpush1.bf16.msra.mxu0 %v622
        %671 = vmatprep.mubr.bf16.mxu0 %v480
        %672 = vmatmul.mubr.bf16.gmra.mrb[0].mxu0 %v479
        %v673 = vpop.f32.mrb[0].mxu0
        %v674 = vadd.f32 %v381, %v673
        %v675 = vpop.f32.mrb[0].mxu0
        %v676 = vpop.f32.mrb[0].mxu0
        %v677 = vadd.f32 %v381, %v676
        %v678 = vpop.f32.mrb[0].mxu0
        %679 = vmatprep.mubr.bf16.mxu0 %v482
        %680 = vmatmul.mubr.bf16.gmra.mrb[0].mxu0 %v481
        %v681 = vpop.f32.mrb[0].mxu0
        %v682 = vadd.f32 %v381, %v681
        %v683 = vpop.f32.mrb[0].mxu0
        %v684 = vpop.f32.mrb[0].mxu0
        %v685 = vadd.f32 %v381, %v684
        %v686 = vpop.f32.mrb[0].mxu0
        %687 = vmatprep.mubr.bf16.mxu0 %v484
        %688 = vmatmul.mubr.bf16.gmra.mrb[0].mxu0 %v483
        %v689 = vpop.f32.mrb[0].mxu0
        %v690 = vadd.f32 %v381, %v689
        %v691 = vpop.f32.mrb[0].mxu0
        %v692 = vpop.f32.mrb[0].mxu0
        %v693 = vadd.f32 %v381, %v692
        %v694 = vpop.f32.mrb[0].mxu0
        %695 = vmatprep.mubr.bf16.mxu0 %v486
        %696 = vmatmul.mubr.bf16.gmra.mrb[0].mxu0 %v485
        %v697 = vpop.f32.mrb[0].mxu0
        %v698 = vadd.f32 %v381, %v697
        %v699 = vpop.f32.mrb[0].mxu0
        %v700 = vpop.f32.mrb[0].mxu0
        %v701 = vadd.f32 %v381, %v700
        %v702 = vpop.f32.mrb[0].mxu0
        %703 = vmatprep.mubr.bf16.mxu0 %v488
        %704 = vmatmul.mubr.bf16.gmra.mrb[0].mxu0 %v487
        %v705 = vpop.f32.mrb[0].mxu0
        %v706 = vadd.f32 %v381, %v705
        %v707 = vpop.f32.mrb[0].mxu0
        %v708 = vpop.f32.mrb[0].mxu0
        %v709 = vadd.f32 %v381, %v708
        %v710 = vpop.f32.mrb[0].mxu0
        %711 = vmatprep.mubr.bf16.mxu0 %v490
        %712 = vmatmul.mubr.bf16.gmra.mrb[0].mxu0 %v489
        %v713 = vpop.f32.mrb[0].mxu0
        %v714 = vadd.f32 %v381, %v713
        %v715 = vpop.f32.mrb[0].mxu0
        %v716 = vpop.f32.mrb[0].mxu0
        %v717 = vadd.f32 %v381, %v716
        %v718 = vpop.f32.mrb[0].mxu0
        %719 = vmatprep.mubr.bf16.mxu0 %v492
        %720 = vmatmul.mubr.bf16.gmra.mrb[0].mxu0 %v491
        %v721 = vpop.f32.mrb[0].mxu0
        %v722 = vadd.f32 %v381, %v721
        %v723 = vpop.f32.mrb[0].mxu0
        %v724 = vpop.f32.mrb[0].mxu0
        %v725 = vadd.f32 %v381, %v724
        %v726 = vpop.f32.mrb[0].mxu0
        %727 = vmatprep.mubr.bf16.mxu0 %v494
        %728 = vmatmul.mubr.bf16.gmra.mrb[0].mxu0 %v493
        %v729 = vpop.f32.mrb[0].mxu0
        %v730 = vadd.f32 %v381, %v729
        %v731 = vpop.f32.mrb[0].mxu0
        %v732 = vpop.f32.mrb[0].mxu0
        %v733 = vadd.f32 %v381, %v732
        %v734 = vpop.f32.mrb[0].mxu0
        %735 = vmatprep.mubr.bf16.mxu0 %v496
        %736 = vmatmul.mubr.bf16.gmra.mrb[0].mxu0 %v495
        %v737 = vpop.f32.mrb[0].mxu0
        %v738 = vadd.f32 %v381, %v737
        %v739 = vpop.f32.mrb[0].mxu0
        %v740 = vpop.f32.mrb[0].mxu0
        %v741 = vadd.f32 %v381, %v740
        %v742 = vpop.f32.mrb[0].mxu0
        %743 = vmatprep.mubr.bf16.mxu0 %v498
        %744 = vmatmul.mubr.bf16.gmra.mrb[0].mxu0 %v497
        %v745 = vpop.f32.mrb[0].mxu0
        %v746 = vadd.f32 %v381, %v745
        %v747 = vpop.f32.mrb[0].mxu0
        %v748 = vpop.f32.mrb[0].mxu0
        %v749 = vadd.f32 %v381, %v748
        %v750 = vpop.f32.mrb[0].mxu0
        %751 = vmatprep.mubr.bf16.mxu0 %v500
        %752 = vmatmul.mubr.bf16.gmra.mrb[0].mxu0 %v499
        %v753 = vpop.f32.mrb[0].mxu0
        %v754 = vadd.f32 %v381, %v753
        %v755 = vpop.f32.mrb[0].mxu0
        %v756 = vpop.f32.mrb[0].mxu0
        %v757 = vadd.f32 %v381, %v756
        %v758 = vpop.f32.mrb[0].mxu0
        %759 = vmatprep.mubr.bf16.mxu0 %v502
        %760 = vmatmul.mubr.bf16.gmra.mrb[0].mxu0 %v501
        %v761 = vpop.f32.mrb[0].mxu0
        %v762 = vadd.f32 %v381, %v761
        %v763 = vpop.f32.mrb[0].mxu0
        %v764 = vpop.f32.mrb[0].mxu0
        %v765 = vadd.f32 %v381, %v764
        %v766 = vpop.f32.mrb[0].mxu0
        %767 = vmatprep.mubr.bf16.mxu0 %v504
        %768 = vmatmul.mubr.bf16.gmra.mrb[0].mxu0 %v503
        %v769 = vpop.f32.mrb[0].mxu0
        %v770 = vadd.f32 %v381, %v769
        %v771 = vpop.f32.mrb[0].mxu0
        %v772 = vpop.f32.mrb[0].mxu0
        %v773 = vadd.f32 %v381, %v772
        %v774 = vpop.f32.mrb[0].mxu0
        %775 = vmatprep.mubr.bf16.mxu0 %v506
        %776 = vmatmul.mubr.bf16.gmra.mrb[0].mxu0 %v505
        %v777 = vpop.f32.mrb[0].mxu0
        %v778 = vadd.f32 %v381, %v777
        %v779 = vpop.f32.mrb[0].mxu0
        %v780 = vpop.f32.mrb[0].mxu0
        %v781 = vadd.f32 %v381, %v780
        %v782 = vpop.f32.mrb[0].mxu0
        %783 = vmatprep.mubr.bf16.mxu0 %v508
        %784 = vmatmul.mubr.bf16.gmra.mrb[0].mxu0 %v507
        %v785 = vpop.f32.mrb[0].mxu0
        %v786 = vadd.f32 %v381, %v785
        %v787 = vpop.f32.mrb[0].mxu0
        %v788 = vpop.f32.mrb[0].mxu0
        %v789 = vadd.f32 %v381, %v788
        %v790 = vpop.f32.mrb[0].mxu0
        %791 = vmatprep.mubr.bf16.mxu0 %v510
        %792 = vmatmul.mubr.bf16.gmra.mrb[0].mxu0 %v509
        %v793 = vpop.f32.mrb[0].mxu0
        %v794 = vadd.f32 %v381, %v793
        %v795 = vpop.f32.mrb[0].mxu0
        %v796 = vpop.f32.mrb[0].mxu0
        %v797 = vadd.f32 %v381, %v796
        %v798 = vpop.f32.mrb[0].mxu0
        %799 = vdwg.mxu0
        %v800 = vpack.c.bf16 %v677, %v674
        %v801 = vpack.c.bf16 %v685, %v682
        %v802 = vpack.c.bf16 %v693, %v690
        %v803 = vpack.c.bf16 %v701, %v698
        %v804 = vpack.c.bf16 %v709, %v706
        %v805 = vpack.c.bf16 %v717, %v714
        %v806 = vpack.c.bf16 %v725, %v722
        %v807 = vpack.c.bf16 %v733, %v730
        %v808 = vpack.c.bf16 %v741, %v738
        %v809 = vpack.c.bf16 %v749, %v746
        %v810 = vpack.c.bf16 %v757, %v754
        %v811 = vpack.c.bf16 %v765, %v762
        %v812 = vpack.c.bf16 %v773, %v770
        %v813 = vpack.c.bf16 %v781, %v778
        %v814 = vpack.c.bf16 %v789, %v786
        %v815 = vpack.c.bf16 %v797, %v794
        %v832 = vunpack.c.l.b16 %v800
        %v833 = vunpack.c.h.b16 %v800
        %v834 = vunpack.c.l.b16 %v801
        %v835 = vunpack.c.h.b16 %v801
        %v836 = vunpack.c.l.b16 %v802
        %v837 = vunpack.c.h.b16 %v802
        %v838 = vunpack.c.l.b16 %v803
        %v839 = vunpack.c.h.b16 %v803
        %v840 = vunpack.c.l.b16 %v804
        %v841 = vunpack.c.h.b16 %v804
        %v842 = vunpack.c.l.b16 %v805
        %v843 = vunpack.c.h.b16 %v805
        %v844 = vunpack.c.l.b16 %v806
        %v845 = vunpack.c.h.b16 %v806
        %v846 = vunpack.c.l.b16 %v807
        %v847 = vunpack.c.h.b16 %v807
        %v848 = vunpack.c.l.b16 %v808
        %v849 = vunpack.c.h.b16 %v808
        %v850 = vunpack.c.l.b16 %v809
        %v851 = vunpack.c.h.b16 %v809
        %v852 = vunpack.c.l.b16 %v810
        %v853 = vunpack.c.h.b16 %v810
        %v854 = vunpack.c.l.b16 %v811
        %v855 = vunpack.c.h.b16 %v811
        %v856 = vunpack.c.l.b16 %v812
        %v857 = vunpack.c.h.b16 %v812
        %v858 = vunpack.c.l.b16 %v813
        %v859 = vunpack.c.h.b16 %v813
        %v860 = vunpack.c.l.b16 %v814
        %v861 = vunpack.c.h.b16 %v814
        %v862 = vunpack.c.l.b16 %v815
        %v863 = vunpack.c.h.b16 %v815
        %v864 = vpack.c.b16 %v832, %v832
        %v865 = vpack.c.b16 %v833, %v833
        %v866 = vpack.c.b16 %v834, %v834
        %v867 = vpack.c.b16 %v835, %v835
        %v868 = vpack.c.b16 %v836, %v836
        %v869 = vpack.c.b16 %v837, %v837
        %v870 = vpack.c.b16 %v838, %v838
        %v871 = vpack.c.b16 %v839, %v839
        %v872 = vpack.c.b16 %v840, %v840
        %v873 = vpack.c.b16 %v841, %v841
        %v874 = vpack.c.b16 %v842, %v842
        %v875 = vpack.c.b16 %v843, %v843
        %v876 = vpack.c.b16 %v844, %v844
        %v877 = vpack.c.b16 %v845, %v845
        %v878 = vpack.c.b16 %v846, %v846
        %v879 = vpack.c.b16 %v847, %v847
        %v880 = vpack.c.b16 %v848, %v848
        %v881 = vpack.c.b16 %v849, %v849
        %v882 = vpack.c.b16 %v850, %v850
        %v883 = vpack.c.b16 %v851, %v851
        %v884 = vpack.c.b16 %v852, %v852
        %v885 = vpack.c.b16 %v853, %v853
        %v886 = vpack.c.b16 %v854, %v854
        %v887 = vpack.c.b16 %v855, %v855
        %v888 = vpack.c.b16 %v856, %v856
        %v889 = vpack.c.b16 %v857, %v857
        %v890 = vpack.c.b16 %v858, %v858
        %v891 = vpack.c.b16 %v859, %v859
        %v892 = vpack.c.b16 %v860, %v860
        %v893 = vpack.c.b16 %v861, %v861
        %v894 = vpack.c.b16 %v862, %v862
        %v895 = vpack.c.b16 %v863, %v863
        %928 = vst [vmem:[%s263] sm:$0xf] %v864
        %929 = vst [vmem:[%s263 + $0x4] sm:$0xf] %v865
        %930 = vst [vmem:[%s263 + $0x8] sm:$0xf] %v866
        %931 = vst [vmem:[%s263 + $0xc] sm:$0xf] %v867
        %932 = vst [vmem:[%s263 + $0x10] sm:$0xf] %v868
        %933 = vst [vmem:[%s263 + $0x14] sm:$0xf] %v869
        %934 = vst [vmem:[%s263 + $0x18] sm:$0xf] %v870
        %935 = vst [vmem:[%s263 + $0x1c] sm:$0xf] %v871
        %936 = vst [vmem:[%s263 + $0x20] sm:$0xf] %v872
        %937 = vst [vmem:[%s263 + $0x24] sm:$0xf] %v873
        %938 = vst [vmem:[%s263 + $0x28] sm:$0xf] %v874
        %939 = vst [vmem:[%s263 + $0x2c] sm:$0xf] %v875
        %940 = vst [vmem:[%s263 + $0x30] sm:$0xf] %v876
        %941 = vst [vmem:[%s263 + $0x34] sm:$0xf] %v877
        %942 = vst [vmem:[%s263 + $0x38] sm:$0xf] %v878
        %943 = vst [vmem:[%s263 + $0x3c] sm:$0xf] %v879
        %944 = vst [vmem:[%s263 + $0x40] sm:$0xf] %v880
        %945 = vst [vmem:[%s263 + $0x44] sm:$0xf] %v881
        %946 = vst [vmem:[%s263 + $0x48] sm:$0xf] %v882
        %947 = vst [vmem:[%s263 + $0x4c] sm:$0xf] %v883
        %948 = vst [vmem:[%s263 + $0x50] sm:$0xf] %v884
        %949 = vst [vmem:[%s263 + $0x54] sm:$0xf] %v885
        %950 = vst [vmem:[%s263 + $0x58] sm:$0xf] %v886
        %951 = vst [vmem:[%s263 + $0x5c] sm:$0xf] %v887
        %952 = vst [vmem:[%s263 + $0x60] sm:$0xf] %v888
        %953 = vst [vmem:[%s263 + $0x64] sm:$0xf] %v889
        %954 = vst [vmem:[%s263 + $0x68] sm:$0xf] %v890
        %955 = vst [vmem:[%s263 + $0x6c] sm:$0xf] %v891
        %956 = vst [vmem:[%s263 + $0x70] sm:$0xf] %v892
        %957 = vst [vmem:[%s263 + $0x74] sm:$0xf] %v893
        %958 = vst [vmem:[%s263 + $0x78] sm:$0xf] %v894
        %959 = vst [vmem:[%s263 + $0x7c] sm:$0xf] %v895
        %v960 = vlaneseq
        %v961 = vshrl.u32 %v960, 7
        %v962 = vadd.s32 %v961, 8
        %v963 = vadd.s32 %v961, 16
        %v964 = vadd.s32 %v961, 24
        %v965 = vadd.s32 %v961, 32
        %v966 = vadd.s32 %v961, 40
        %v967 = vadd.s32 %v961, 48
        %v968 = vadd.s32 %v961, 56
        %v969 = vadd.s32 %v961, 64
        %v970 = vadd.s32 %v961, 72
        %v971 = vadd.s32 %v961, 80
        %v972 = vadd.s32 %v961, 88
        %v973 = vadd.s32 %v961, 96
        %v974 = vadd.s32 %v961, 104
        %v975 = vadd.s32 %v961, 112
        %v976 = vadd.s32 %v961, 120
        %v977 = vadd.s32 %v961, 128
        %v978 = vadd.s32 %v961, 136
        %v979 = vadd.s32 %v961, 144
        %v980 = vadd.s32 %v961, 152
        %v981 = vadd.s32 %v961, 160
        %v982 = vadd.s32 %v961, 168
        %v983 = vadd.s32 %v961, 176
        %v984 = vadd.s32 %v961, 184
        %v985 = vadd.s32 %v961, 192
        %v986 = vadd.s32 %v961, 200
        %v987 = vadd.s32 %v961, 208
        %v988 = vadd.s32 %v961, 216
        %v989 = vadd.s32 %v961, 224
        %v990 = vadd.s32 %v961, 232
        %v991 = vadd.s32 %v961, 240
        %v992 = vadd.s32 %v961, 248
        %s993 = smul.u32 %s24, 256
        %v994 = vstv %s993
        %v995 = vadd.s32 %v961, %v994
        %v996 = vadd.s32 %v962, %v994
        %v997 = vadd.s32 %v963, %v994
        %v998 = vadd.s32 %v964, %v994
        %v999 = vadd.s32 %v965, %v994
        %v1000 = vadd.s32 %v966, %v994
        %v1001 = vadd.s32 %v967, %v994
        %v1002 = vadd.s32 %v968, %v994
        %v1003 = vadd.s32 %v969, %v994
        %v1004 = vadd.s32 %v970, %v994
        %v1005 = vadd.s32 %v971, %v994
        %v1006 = vadd.s32 %v972, %v994
        %v1007 = vadd.s32 %v973, %v994
        %v1008 = vadd.s32 %v974, %v994
        %v1009 = vadd.s32 %v975, %v994
        %v1010 = vadd.s32 %v976, %v994
        %v1011 = vadd.s32 %v977, %v994
        %v1012 = vadd.s32 %v978, %v994
        %v1013 = vadd.s32 %v979, %v994
        %v1014 = vadd.s32 %v980, %v994
        %v1015 = vadd.s32 %v981, %v994
        %v1016 = vadd.s32 %v982, %v994
        %v1017 = vadd.s32 %v983, %v994
        %v1018 = vadd.s32 %v984, %v994
        %v1019 = vadd.s32 %v985, %v994
        %v1020 = vadd.s32 %v986, %v994
        %v1021 = vadd.s32 %v987, %v994
        %v1022 = vadd.s32 %v988, %v994
        %v1023 = vadd.s32 %v989, %v994
        %v1024 = vadd.s32 %v990, %v994
        %v1025 = vadd.s32 %v991, %v994
        %v1026 = vadd.s32 %v992, %v994
        %vm1027 = vcmp.lt.s32.totalorder %v995, 512
        %vm1028 = vcmp.lt.s32.totalorder %v996, 512
        %vm1029 = vcmp.lt.s32.totalorder %v997, 512
        %vm1030 = vcmp.lt.s32.totalorder %v998, 512
        %vm1031 = vcmp.lt.s32.totalorder %v999, 512
        %vm1032 = vcmp.lt.s32.totalorder %v1000, 512
        %vm1033 = vcmp.lt.s32.totalorder %v1001, 512
        %vm1034 = vcmp.lt.s32.totalorder %v1002, 512
        %vm1035 = vcmp.lt.s32.totalorder %v1003, 512
        %vm1036 = vcmp.lt.s32.totalorder %v1004, 512
        %vm1037 = vcmp.lt.s32.totalorder %v1005, 512
        %vm1038 = vcmp.lt.s32.totalorder %v1006, 512
        %vm1039 = vcmp.lt.s32.totalorder %v1007, 512
        %vm1040 = vcmp.lt.s32.totalorder %v1008, 512
        %vm1041 = vcmp.lt.s32.totalorder %v1009, 512
        %vm1042 = vcmp.lt.s32.totalorder %v1010, 512
        %vm1043 = vcmp.lt.s32.totalorder %v1011, 512
        %vm1044 = vcmp.lt.s32.totalorder %v1012, 512
        %vm1045 = vcmp.lt.s32.totalorder %v1013, 512
        %vm1046 = vcmp.lt.s32.totalorder %v1014, 512
        %vm1047 = vcmp.lt.s32.totalorder %v1015, 512
        %vm1048 = vcmp.lt.s32.totalorder %v1016, 512
        %vm1049 = vcmp.lt.s32.totalorder %v1017, 512
        %vm1050 = vcmp.lt.s32.totalorder %v1018, 512
        %vm1051 = vcmp.lt.s32.totalorder %v1019, 512
        %vm1052 = vcmp.lt.s32.totalorder %v1020, 512
        %vm1053 = vcmp.lt.s32.totalorder %v1021, 512
        %vm1054 = vcmp.lt.s32.totalorder %v1022, 512
        %vm1055 = vcmp.lt.s32.totalorder %v1023, 512
        %vm1056 = vcmp.lt.s32.totalorder %v1024, 512
        %vm1057 = vcmp.lt.s32.totalorder %v1025, 512
        %vm1058 = vcmp.lt.s32.totalorder %v1026, 512
        %v1059 = vsel %vm1027, %v674, 0.0
        %v1060 = vsel %vm1028, %v677, 0.0
        %v1061 = vsel %vm1029, %v682, 0.0
        %v1062 = vsel %vm1030, %v685, 0.0
        %v1063 = vsel %vm1031, %v690, 0.0
        %v1064 = vsel %vm1032, %v693, 0.0
        %v1065 = vsel %vm1033, %v698, 0.0
        %v1066 = vsel %vm1034, %v701, 0.0
        %v1067 = vsel %vm1035, %v706, 0.0
        %v1068 = vsel %vm1036, %v709, 0.0
        %v1069 = vsel %vm1037, %v714, 0.0
        %v1070 = vsel %vm1038, %v717, 0.0
        %v1071 = vsel %vm1039, %v722, 0.0
        %v1072 = vsel %vm1040, %v725, 0.0
        %v1073 = vsel %vm1041, %v730, 0.0
        %v1074 = vsel %vm1042, %v733, 0.0
        %v1075 = vsel %vm1043, %v738, 0.0
        %v1076 = vsel %vm1044, %v741, 0.0
        %v1077 = vsel %vm1045, %v746, 0.0
        %v1078 = vsel %vm1046, %v749, 0.0
        %v1079 = vsel %vm1047, %v754, 0.0
        %v1080 = vsel %vm1048, %v757, 0.0
        %v1081 = vsel %vm1049, %v762, 0.0
        %v1082 = vsel %vm1050, %v765, 0.0
        %v1083 = vsel %vm1051, %v770, 0.0
        %v1084 = vsel %vm1052, %v773, 0.0
        %v1085 = vsel %vm1053, %v778, 0.0
        %v1086 = vsel %vm1054, %v781, 0.0
        %v1087 = vsel %vm1055, %v786, 0.0
        %v1088 = vsel %vm1056, %v789, 0.0
        %v1089 = vsel %vm1057, %v794, 0.0
        %v1090 = vsel %vm1058, %v797, 0.0
        %v1091 = vadd.f32 %v1059, %v1060
        %v1092 = vadd.f32 %v1091, %v1061
        %v1093 = vadd.f32 %v1092, %v1062
        %v1094 = vadd.f32 %v1093, %v1063
        %v1095 = vadd.f32 %v1094, %v1064
        %v1096 = vadd.f32 %v1095, %v1065
        %v1097 = vadd.f32 %v1096, %v1066
        %v1098 = vadd.f32 %v1097, %v1067
        %v1099 = vadd.f32 %v1098, %v1068
        %v1100 = vadd.f32 %v1099, %v1069
        %v1101 = vadd.f32 %v1100, %v1070
        %v1102 = vadd.f32 %v1101, %v1071
        %v1103 = vadd.f32 %v1102, %v1072
        %v1104 = vadd.f32 %v1103, %v1073
        %v1105 = vadd.f32 %v1104, %v1074
        %v1106 = vadd.f32 %v1105, %v1075
        %v1107 = vadd.f32 %v1106, %v1076
        %v1108 = vadd.f32 %v1107, %v1077
        %v1109 = vadd.f32 %v1108, %v1078
        %v1110 = vadd.f32 %v1109, %v1079
        %v1111 = vadd.f32 %v1110, %v1080
        %v1112 = vadd.f32 %v1111, %v1081
        %v1113 = vadd.f32 %v1112, %v1082
        %v1114 = vadd.f32 %v1113, %v1083
        %v1115 = vadd.f32 %v1114, %v1084
        %v1116 = vadd.f32 %v1115, %v1085
        %v1117 = vadd.f32 %v1116, %v1086
        %v1118 = vadd.f32 %v1117, %v1087
        %v1119 = vadd.f32 %v1118, %v1088
        %v1120 = vadd.f32 %v1119, %v1089
        %v1121 = vadd.f32 %v1120, %v1090
        %v1122 = vrot.slane %v1121, 4
        %v1123 = vadd.f32 %v1121, %v1122
        %v1124 = vrot.slane %v1123, 2
        %v1125 = vadd.f32 %v1123, %v1124
        %v1126 = vrot.slane %v1125, 1
        %v1127 = vadd.f32 %v1125, %v1126
        %1128 = vst [vmem:[%s303] sm:$0xff] %v1127
        %v1129 = vmul.f32 %v1059, %v1059
        %v1130 = vmul.f32 %v1060, %v1060
        %v1131 = vmul.f32 %v1061, %v1061
        %v1132 = vmul.f32 %v1062, %v1062
        %v1133 = vmul.f32 %v1063, %v1063
        %v1134 = vmul.f32 %v1064, %v1064
        %v1135 = vmul.f32 %v1065, %v1065
        %v1136 = vmul.f32 %v1066, %v1066
        %v1137 = vmul.f32 %v1067, %v1067
        %v1138 = vmul.f32 %v1068, %v1068
        %v1139 = vmul.f32 %v1069, %v1069
        %v1140 = vmul.f32 %v1070, %v1070
        %v1141 = vmul.f32 %v1071, %v1071
        %v1142 = vmul.f32 %v1072, %v1072
        %v1143 = vmul.f32 %v1073, %v1073
        %v1144 = vmul.f32 %v1074, %v1074
        %v1145 = vmul.f32 %v1075, %v1075
        %v1146 = vmul.f32 %v1076, %v1076
        %v1147 = vmul.f32 %v1077, %v1077
        %v1148 = vmul.f32 %v1078, %v1078
        %v1149 = vmul.f32 %v1079, %v1079
        %v1150 = vmul.f32 %v1080, %v1080
        %v1151 = vmul.f32 %v1081, %v1081
        %v1152 = vmul.f32 %v1082, %v1082
        %v1153 = vmul.f32 %v1083, %v1083
        %v1154 = vmul.f32 %v1084, %v1084
        %v1155 = vmul.f32 %v1085, %v1085
        %v1156 = vmul.f32 %v1086, %v1086
        %v1157 = vmul.f32 %v1087, %v1087
        %v1158 = vmul.f32 %v1088, %v1088
        %v1159 = vmul.f32 %v1089, %v1089
        %v1160 = vmul.f32 %v1090, %v1090
        %v1161 = vadd.f32 %v1129, %v1130
        %v1162 = vadd.f32 %v1161, %v1131
        %v1163 = vadd.f32 %v1162, %v1132
        %v1164 = vadd.f32 %v1163, %v1133
        %v1165 = vadd.f32 %v1164, %v1134
        %v1166 = vadd.f32 %v1165, %v1135
        %v1167 = vadd.f32 %v1166, %v1136
        %v1168 = vadd.f32 %v1167, %v1137
        %v1169 = vadd.f32 %v1168, %v1138
        %v1170 = vadd.f32 %v1169, %v1139
        %v1171 = vadd.f32 %v1170, %v1140
        %v1172 = vadd.f32 %v1171, %v1141
        %v1173 = vadd.f32 %v1172, %v1142
        %v1174 = vadd.f32 %v1173, %v1143
        %v1175 = vadd.f32 %v1174, %v1144
        %v1176 = vadd.f32 %v1175, %v1145
        %v1177 = vadd.f32 %v1176, %v1146
        %v1178 = vadd.f32 %v1177, %v1147
        %v1179 = vadd.f32 %v1178, %v1148
        %v1180 = vadd.f32 %v1179, %v1149
        %v1181 = vadd.f32 %v1180, %v1150
        %v1182 = vadd.f32 %v1181, %v1151
        %v1183 = vadd.f32 %v1182, %v1152
        %v1184 = vadd.f32 %v1183, %v1153
        %v1185 = vadd.f32 %v1184, %v1154
        %v1186 = vadd.f32 %v1185, %v1155
        %v1187 = vadd.f32 %v1186, %v1156
        %v1188 = vadd.f32 %v1187, %v1157
        %v1189 = vadd.f32 %v1188, %v1158
        %v1190 = vadd.f32 %v1189, %v1159
        %v1191 = vadd.f32 %v1190, %v1160
        %v1192 = vrot.slane %v1191, 4
        %v1193 = vadd.f32 %v1191, %v1192
        %v1194 = vrot.slane %v1193, 2
        %v1195 = vadd.f32 %v1193, %v1194
        %v1196 = vrot.slane %v1195, 1
        %v1197 = vadd.f32 %v1195, %v1196
        %1198 = vst [vmem:[%s310] sm:$0xff] %v1197
        %s1199 = sand.u32 %s120, 1
        %s1200 = scalar_lea.sflag [#allocation3], %s1199
        %s1201 = sand.u32 %s120, 1
        %s1202 = smul.addr %s1201, 128
        %s1203 = scalar_lea.vmem [#allocation2], %s1202
        %p1204 = scmp.lt.s32.totalorder %s24, 1
        %s1205 = scalar_select %p1204, %s24, 1
        %p1206 = scmp.lt.s32.totalorder %s25, 0
        %s1207 = scalar_select %p1206, %s25, 0
        %s1208 = sadd.s32 %s1207, %s1205
        %s1209 = smul.addr %s1208, 8
        %s1210 = scalar_lea.vmem %s4, %s1209
        %p1211 = scmp.lt.s32.totalorder %s24, 1
        %s1212 = scalar_select %p1211, %s24, 1
        %p1213 = scmp.lt.s32.totalorder %s25, 0
        %s1214 = scalar_select %p1213, %s25, 0
        %s1215 = sadd.s32 %s1214, %s1212
        %s1216 = smul.addr %s1215, 8
        %s1217 = scalar_lea.vmem %s5, %s1216
        // Predicated region
        $region33: #{conv2d.1} parent=31 // pred_check
          %p1218 = pneg %p130
        $region34: #{conv2d.1} parent=31 // pred_check_branch
          %1220 = sbr.rel (%p1218) target = $region36
        $region35: #{conv2d.1} parent=31 // pred_region
          %s1221 = smul.u32 32, %s24
          %s1223 = ssub.s32 2048, 2048
          %1224 = vsyncadd %s1200, %s1223
          %s1225 = sadd.s32 %s25, %s1221
          %s1226 = smul.addr %s1225, 64
          %s1227 = scalar_lea.hbm %s3, %s1226
          %s1228 = sshll.u32 %s1203, 4
          %s1229 = int_to_ptr.vmem [resolvable:$true] %s1228
          %1234 = dma.vmem_to_hbm [thread:$0]  %s1229, 2048, %s1227, %s1200, 64, 64, 4
        $region36: #{conv2d.1} parent=31 // pred_fallthru
          _
        // Predicated region
        $region37: #{conv2d.1} parent=31 // pred_check
          %p1235 = pneg %p158
        $region38: #{conv2d.1} parent=31 // pred_check_branch
          %1237 = sbr.rel (%p1235) target = $region40
        $region39: #{conv2d.1} parent=31 // pred_region
          _
        $region40: #{conv2d.1} parent=31 // pred_fallthru
          _
        // Predicated region
        $region41: #{conv2d.1} parent=31 // pred_check
          %p1238 = pneg %p186
        $region42: #{conv2d.1} parent=31 // pred_check_branch
          %1240 = sbr.rel (%p1238) target = $region44
        $region43: #{conv2d.1} parent=31 // pred_region
          _
        $region44: #{conv2d.1} parent=31 // pred_fallthru
          _
      $region32: #{conv2d.1} parent=5 // pred_fallthru
        _
      %p1241 = scmp.le.s32.totalorder 2, %s15
      // Predicated region
      $region45: #{conv2d.1} parent=5 // pred_check
        %p1242 = pneg %p1241
      $region46: #{conv2d.1} parent=5 // pred_check_branch
        %1244 = sbr.rel (%p1242) target = $region48
      $region47: #{conv2d.1} parent=5 // pred_region
        %s1245 = ssub.s32 %s15, 2
        // Predicated region
        $region49: #{conv2d.1} parent=47 // pred_check
          %p1246 = pneg %p136
        $region50: #{conv2d.1} parent=47 // pred_check_branch
          %1248 = sbr.rel (%p1246) target = $region52
        $region51: #{conv2d.1} parent=47 // pred_region
          %s1249 = sand.u32 %s121, 1
          %s1250 = scalar_lea.sflag [#allocation3], %s1249
          %s1251 = sand.u32 %s121, 1
          %s1252 = smul.addr %s1251, 128
          %s1253 = scalar_lea.vmem [#allocation2], %s1252
          %1254 = dma.done %s1250, 2048
        $region52: #{conv2d.1} parent=47 // pred_fallthru
          _
        // Predicated region
        $region53: #{conv2d.1} parent=47 // pred_check
          %p1255 = pneg %p164
        $region54: #{conv2d.1} parent=47 // pred_check_branch
          %1257 = sbr.rel (%p1255) target = $region56
        $region55: #{conv2d.1} parent=47 // pred_region
          %p1258 = scmp.lt.s32.totalorder %s26, 1
          %s1259 = scalar_select %p1258, %s26, 1
          %p1260 = scmp.lt.s32.totalorder %s27, 0
          %s1261 = scalar_select %p1260, %s27, 0
          %s1262 = sadd.s32 %s1261, %s1259
          %s1263 = smul.addr %s1262, 8
          %s1264 = scalar_lea.vmem %s4, %s1263
        $region56: #{conv2d.1} parent=47 // pred_fallthru
          _
        // Predicated region
        $region57: #{conv2d.1} parent=47 // pred_check
          %p1265 = pneg %p192
        $region58: #{conv2d.1} parent=47 // pred_check_branch
          %1267 = sbr.rel (%p1265) target = $region60
        $region59: #{conv2d.1} parent=47 // pred_region
          %p1268 = scmp.lt.s32.totalorder %s26, 1
          %s1269 = scalar_select %p1268, %s26, 1
          %p1270 = scmp.lt.s32.totalorder %s27, 0
          %s1271 = scalar_select %p1270, %s27, 0
          %s1272 = sadd.s32 %s1271, %s1269
          %s1273 = smul.addr %s1272, 8
          %s1274 = scalar_lea.vmem %s5, %s1273
        $region60: #{conv2d.1} parent=47 // pred_fallthru
          _
      $region48: #{conv2d.1} parent=5 // pred_fallthru
        _
    $region6: #{conv2d.1} parent=1 // loop_footer
      %s19 = sadd.s32 1, %s15
    $region7: #{conv2d.1} parent=1 // loop_footer_branch
      %14 = sbr.rel target = $region3
    $region8: #{conv2d.1} parent=1 // loop_exit
      _
    %1275 = vsyncpa [#allocation3], 1
    %s1276 = scalar_lea.sflag [#allocation3], 1
    %1277 = vsyncpa %s1276, 1

</llo_original>
